<compile_context>
chip_gen: v7x
topology: tpu7x:2x2x1
jax: 0.10.0
libtpu: 0.0.40
codegen_flags: <defaults>
</compile_context>

<pallas_src>
import functools

import jax
import jax.numpy as jnp
from jax.experimental import pallas as pl
from jax.experimental.pallas import tpu as pltpu


_TAPS_3X3 = tuple((dh, dw) for dh in (-1, 0, 1) for dw in (-1, 0, 1))
_MXU_DTYPE = jnp.bfloat16      # matmul operand dtype (review opt #3)
_CH_PACK = 16                  # channel padding so bf16 sublane packing stays aligned
_ROLL_SIGN = None              # set by _detect_roll_convention(); -1 == jnp.roll convention


# ------------------------------ shared math ---------------------------------
def _mish(x):
    """mish(x) = x*tanh(softplus(x)) = x*n/(n+2), n = e*(e+2), e = exp(x).

    One exp + one divide instead of exp + log1p + tanh.  Kept in f32 with an
    exact divide (approx reciprocal deliberately skipped, see header).
    """
    e = jnp.exp(jnp.minimum(x, 20.0))
    n = e * (e + 2.0)
    return jnp.where(x > 20.0, x, x * n / (n + 2.0))


def _detect_roll_convention():
    """Probe pltpu.roll's shift sign once (outside jit).

    Returns sgn such that pltpu.roll(x, sgn*s, axis=-1)[..., m] == x[..., (m+s) % n].
    jnp.roll convention (the expected one) gives sgn == -1.
    """
    def kern(x_ref, o_ref):
        o_ref[...] = pltpu.roll(x_ref[...], 1, axis=1)

    x = jnp.tile(jnp.arange(128, dtype=jnp.float32)[None, :], (8, 1))
    y = pl.pallas_call(kern, out_shape=jax.ShapeDtypeStruct((8, 128), jnp.float32))(x)
    return -1 if bool(jnp.array_equal(y, jnp.roll(x, 1, axis=1))) else 1


# ------------------------------ fused kernel --------------------------------
def _fused_mapping_kernel(
    x_ref,      # (Cin_p, M)          input block, channel-major, M = imgs_per_block*H*W
    masks_ref,  # (9, 1, M)           per-tap validity masks (zero padding), tiled per image
    lw0_ref,    # (Cm_p, 9*Cin_p)     ladder conv 1 weight (taps folded into K), bf16
    lw_ref,     # (4, Cm_p, 9*Cm_p)   ladder conv 2..5 weights, bf16
    lsc_ref,    # (5, Cm_p, 1)        per-stage affine scale (BN folded; 1 for stage 5)
    lsh_ref,    # (5, Cm_p, 1)        per-stage affine shift (conv bias + BN folded)
    rw1_ref,    # (5, NB, Cm_p, Cm_p) res-block conv1 weights, bf16
    rb1_ref,    # (5, NB, Cm_p, 1)
    rw2_ref,    # (5, NB, Cm_p, Cm_p) res-block conv2 weights, bf16
    rb2_ref,    # (5, NB, Cm_p, 1)
    fw_ref,     # (Cout, Cm_p)        final 1x1 conv, bf16
    fb_ref,     # (Cout, 1)
    o_ref,      # (Cout, M)
    taps_ref,   # scratch (9*Cmax, M) bf16: packed taps -> ONE K=9*Cin matmul per stage
    *,
    width,      # spatial W (static)
    roll_sign,  # static: pltpu.roll sign convention (see _detect_roll_convention)
):
    m = x_ref.shape[-1]
    num_block = rw1_ref.shape[1]

    x = x_ref[...]                                   # (Cin_p, M) f32
    for stage in range(5):
        cin = x.shape[0]
        # --- 9 shifted 3x3 taps via lane rolls (opt #2). Wrapped lanes are
        #     exactly the out-of-bounds ones and are zeroed by the masks, so the
        #     roll may freely wrap across rows and image boundaries.
        k = 0
        for dh in (-1, 0, 1):
            xh = x if dh == 0 else pltpu.roll(x, (roll_sign * dh * width) % m, axis=1)
            for dw in (-1, 0, 1):
                assert _TAPS_3X3[k] == (dh, dw)      # ties shifts to the mask order
                t = xh if dw == 0 else pltpu.roll(xh, (roll_sign * dw) % m, axis=1)
                if dh == 0 and dw == 0:              # center tap: always valid
                    taps_ref[k * cin:(k + 1) * cin, :] = t.astype(taps_ref.dtype)
                else:
                    taps_ref[k * cin:(k + 1) * cin, :] = (
                        t * masks_ref[k]).astype(taps_ref.dtype)
                k += 1
        # --- 3x3 ladder conv as ONE K = 9*cin MXU matmul (bf16 x bf16 -> f32) ---
        wmat = lw0_ref[...] if stage == 0 else lw_ref[stage - 1]
        y = jnp.dot(wmat, taps_ref[0:9 * cin, :], preferred_element_type=jnp.float32)
        # conv bias + BatchNorm folded into a single f32 affine, then Mish
        x = _mish(y * lsc_ref[stage] + lsh_ref[stage])
        # --- num_block ResConv1Blocks (1x1 convs = matmuls) + trailing Mish -----
        # TODO(synk): for large Cm/num_block switch to lax.fori_loop(unroll=True)
        # with x in a VMEM scratch to bound vreg live ranges (review opt #11).
        for i in range(num_block):
            h = _mish(
                jnp.dot(rw1_ref[stage, i], x.astype(rw1_ref.dtype),
                        preferred_element_type=jnp.float32) + rb1_ref[stage, i])
            x = x + jnp.dot(rw2_ref[stage, i], h.astype(rw2_ref.dtype),
                            preferred_element_type=jnp.float32) + rb2_ref[stage, i]
        x = _mish(x)
    # --- final 1x1 conv ------------------------------------------------------
    o_ref[...] = (
        jnp.dot(fw_ref[...], x.astype(fw_ref.dtype),
                preferred_element_type=jnp.float32) + fb_ref[...])


# ------------------------------ call wrapper ---------------------------------
def _round_up(v, mult):
    return ((v + mult - 1) // mult) * mult


def _pad_axis(a, axis, new_size):
    pad = new_size - a.shape[axis]
    if pad == 0:
        return a
    cfg = [(0, 0)] * a.ndim
    cfg[axis] = (0, pad)
    return jnp.pad(a, cfg)


def _fold_conv3x3(w4, cout_p, cin_p):
    """(Cout, Cin, 3, 3) -> (Cout_p, 9*Cin_p), tap-major ordering matching _TAPS_3X3."""
    w4 = _pad_axis(_pad_axis(w4, 0, cout_p), 1, cin_p)
    return jnp.transpose(w4, (0, 2, 3, 1)).reshape(cout_p, -1).astype(_MXU_DTYPE)


def mapping_forward(x_nchw, params, *, imgs_per_block=None):
    n, cin0, h, w = x_nchw.shape
    hw = h * w
    cm = params["bn_scale"].shape[0]
    cout = params["final_w"].shape[0]
    cin_p = _round_up(max(cin0, _CH_PACK), _CH_PACK)
    cm_p = _round_up(cm, _CH_PACK)
    cmax = max(cin_p, cm_p)

    # The wrap-around roll trick is only valid for a 3x3 stencil with
    # |dh|,|dw| <= 1 and H,W >= 2 (every wrapped lane is masked to zero).
    assert h >= 2 and w >= 2
    assert max(abs(dh) for dh, _ in _TAPS_3X3) == 1
    assert max(abs(dw) for _, dw in _TAPS_3X3) == 1

    # ---- lane-batching of images (review opt #1) -----------------------------
    if imgs_per_block is None:
        # Default keeps >= 2 grid steps when possible (both v7x TensorCores get
        # work); on single-core v5e/v6e pass imgs_per_block=n to minimize steps.
        imgs_per_block = max(1, min(4096 // hw, pl.cdiv(n, 2)))
    nb = pl.cdiv(n, imgs_per_block)
    n_pad = nb * imgs_per_block
    m_lanes = imgs_per_block * hw

    x4 = x_nchw.astype(jnp.float32)
    if n_pad != n:
        x4 = jnp.pad(x4, ((0, n_pad - n), (0, 0), (0, 0), (0, 0)))
    x2d = _pad_axis(x4.reshape(n_pad, cin0, hw), 1, cin_p)
    # (nb, imgs, C, HW) -> (nb, C, imgs*HW): channel-major with M on the lane axis
    x2d = x2d.reshape(nb, imgs_per_block, cin_p, hw).transpose(0, 2, 1, 3)
    x2d = x2d.reshape(nb, cin_p, m_lanes)

    # ---- 3x3 tap validity masks (zero padding), tiled across the block's images
    hh = jnp.arange(h)[:, None]
    ww = jnp.arange(w)[None, :]
    masks = []
    for dh, dw in _TAPS_3X3:
        valid = (hh + dh >= 0) & (hh + dh < h) & (ww + dw >= 0) & (ww + dw < w)
        masks.append(valid.astype(jnp.float32).reshape(1, hw))
    masks = jnp.tile(jnp.stack(masks, axis=0), (1, 1, imgs_per_block))  # (9, 1, M)

    # ---- weights: fold taps into K, pad channels, cast MXU operands to bf16 ---
    lw0 = _fold_conv3x3(params["ladder_w"][0], cm_p, cin_p)              # (Cm_p, 9*Cin_p)
    lw = jnp.stack([_fold_conv3x3(params["ladder_w"][s], cm_p, cm_p)
                    for s in range(1, 5)], axis=0)                       # (4, Cm_p, 9*Cm_p)

    # Per-stage affine: stages 0-3 use the shared BatchNorm (eval mode), stage 4
    # has none; conv bias folded in:  y*scale + (b*scale + shift).
    # Padded channels get scale=1 / shift=0 / bias=0 so they stay exactly zero.
    def pad_vec(v, fill):
        return jnp.concatenate(
            [v.astype(jnp.float32), jnp.full((cm_p - v.shape[0],), fill, jnp.float32)])

    bn_scale = pad_vec(params["bn_scale"], 1.0)
    bn_shift = pad_vec(params["bn_shift"], 0.0)
    ones = jnp.ones((cm_p,), jnp.float32)
    zeros = jnp.zeros((cm_p,), jnp.float32)
    lsc_rows, lsh_rows = [], []
    for s in range(5):
        scale = bn_scale if s < 4 else ones
        shift = bn_shift if s < 4 else zeros
        bias = pad_vec(params["ladder_b"][s], 0.0)
        lsc_rows.append(scale)
        lsh_rows.append(bias * scale + shift)
    lsc = jnp.stack(lsc_rows, 0)[:, :, None]          # (5, Cm_p, 1) f32
    lsh = jnp.stack(lsh_rows, 0)[:, :, None]

    rw1 = _pad_axis(_pad_axis(jnp.stack(params["res_w1"], 0), 2, cm_p), 3, cm_p)
    rw2 = _pad_axis(_pad_axis(jnp.stack(params["res_w2"], 0), 2, cm_p), 3, cm_p)
    rw1 = rw1.astype(_MXU_DTYPE)
    rw2 = rw2.astype(_MXU_DTYPE)
    rb1 = _pad_axis(jnp.stack(params["res_b1"], 0), 2, cm_p)[..., None].astype(jnp.float32)
    rb2 = _pad_axis(jnp.stack(params["res_b2"], 0), 2, cm_p)[..., None].astype(jnp.float32)
    fw = _pad_axis(params["final_w"], 1, cm_p).astype(_MXU_DTYPE)        # (Cout, Cm_p)
    fb = params["final_b"][:, None].astype(jnp.float32)                  # (Cout, 1)

    # ---- VMEM budget (review opt #4): must fit v7x's 32 MiB scoped default ----
    consts = [masks, lw0, lw, lsc, lsh, rw1, rb1, rw2, rb2, fw, fb]
    vmem_bytes = (
        2 * cin_p * m_lanes * 4            # input block (double-buffered)
        + 2 * cout * m_lanes * 4           # output block (double-buffered)
        + 9 * cmax * m_lanes * 2           # taps scratch (bf16, single copy)
        + 2 * sum(int(a.size) * a.dtype.itemsize for a in consts))
    assert vmem_bytes < 24 * 1024 * 1024, vmem_bytes

    roll_sign = _ROLL_SIGN if _ROLL_SIGN is not None else -1   # -1 == jnp.roll convention
    kernel = functools.partial(_fused_mapping_kernel, width=w, roll_sign=roll_sign)

    out = pl.pallas_call(
        kernel,
        out_shape=jax.ShapeDtypeStruct((nb, cout, m_lanes), jnp.float32),
        grid=(nb,),
        in_specs=[
            pl.BlockSpec((None, cin_p, m_lanes), lambda i: (i, 0, 0)),
            # Constant operands (constant index_map).  TODO(synk): mark them
            # pipeline_mode=pl.Buffered(1) once Cm/num_block grow and the 2x
            # weight VMEM footprint matters (review opt #6) — negligible here.
            pl.BlockSpec(masks.shape, lambda i: (0, 0, 0)),
            pl.BlockSpec(lw0.shape, lambda i: (0, 0)),
            pl.BlockSpec(lw.shape, lambda i: (0, 0, 0)),
            pl.BlockSpec(lsc.shape, lambda i: (0, 0, 0)),
            pl.BlockSpec(lsh.shape, lambda i: (0, 0, 0)),
            pl.BlockSpec(rw1.shape, lambda i: (0, 0, 0, 0)),
            pl.BlockSpec(rb1.shape, lambda i: (0, 0, 0, 0)),
            pl.BlockSpec(rw2.shape, lambda i: (0, 0, 0, 0)),
            pl.BlockSpec(rb2.shape, lambda i: (0, 0, 0, 0)),
            pl.BlockSpec(fw.shape, lambda i: (0, 0)),
            pl.BlockSpec(fb.shape, lambda i: (0, 0)),
        ],
        out_specs=pl.BlockSpec((None, cout, m_lanes), lambda i: (i, 0, 0)),
        scratch_shapes=[pltpu.VMEM((9 * cmax, m_lanes), _MXU_DTYPE)],
        compiler_params=pltpu.CompilerParams(
            dimension_semantics=("parallel",),
            vmem_limit_bytes=32 * 1024 * 1024),
    )(x2d, masks, lw0, lw, lsc, lsh, rw1, rb1, rw2, rb2, fw, fb)

    # back to NCHW
    out = out.reshape(nb, cout, imgs_per_block, hw).transpose(0, 2, 1, 3)
    out = out.reshape(n_pad, cout, h, w)
    return out[:n]


# ------------------------------ parameter init ------------------------------
def init_params(key, in_channel, middle_channel, out_channel, num_block):
    cin0 = in_channel // 2
    keys = iter(jax.random.split(key, 64))

    def nrm(shape, scale=0.1):
        return scale * jax.random.normal(next(keys), shape, jnp.float32)

    p = {}
    lad_cins = [cin0] + [middle_channel] * 4
    p["ladder_w"] = [nrm((middle_channel, c, 3, 3)) for c in lad_cins]   # OIHW
    p["ladder_b"] = [nrm((middle_channel,), 0.05) for _ in range(5)]

    # single shared BatchNorm2d (eval mode), folded into scale / shift
    gamma = 1.0 + nrm((middle_channel,), 0.1)
    beta = nrm((middle_channel,), 0.1)
    rmean = nrm((middle_channel,), 0.1)
    rvar = 1.0 + 0.1 * jnp.abs(
        jax.random.normal(next(keys), (middle_channel,), jnp.float32))
    p["bn_scale"] = gamma / jnp.sqrt(rvar + 1e-5)
    p["bn_shift"] = beta - rmean * p["bn_scale"]

    # 5 residual stages, each = Sequential of num_block ResConv1Blocks (1x1 convs)
    p["res_w1"] = [nrm((num_block, middle_channel, middle_channel)) for _ in range(5)]
    p["res_b1"] = [nrm((num_block, middle_channel), 0.05) for _ in range(5)]
    p["res_w2"] = [nrm((num_block, middle_channel, middle_channel)) for _ in range(5)]
    p["res_b2"] = [nrm((num_block, middle_channel), 0.05) for _ in range(5)]

    # self.conv is created in __init__ but never used in forward (kept for parity)
    p["mid_conv_w"] = nrm((middle_channel, middle_channel))
    p["mid_conv_b"] = nrm((middle_channel,), 0.05)

    # final 1x1 conv, (Cout, Cin)
    p["final_w"] = nrm((out_channel, middle_channel))
    p["final_b"] = nrm((out_channel,), 0.05)
    return p


# ------------------------------ reference path -------------------------------
def ref_forward(x_nchw, params, matmul_dtype=jnp.float32):
    """Independent pure-JAX reference (lax.conv / einsum).

    matmul_dtype=bfloat16 reproduces the kernel's MXU operand precision (with
    f32 accumulation and f32 element-wise math) as a tight parity target.
    """
    hp = jax.lax.Precision.HIGHEST
    md = matmul_dtype
    x = x_nchw.astype(jnp.float32)
    scale = params["bn_scale"][None, :, None, None]
    shift = params["bn_shift"][None, :, None, None]
    dn = ("NCHW", "OIHW", "NCHW")
    for s in range(5):
        y = jax.lax.conv_general_dilated(
            x.astype(md), params["ladder_w"][s].astype(md), window_strides=(1, 1),
            padding=((1, 1), (1, 1)), dimension_numbers=dn, precision=hp,
            preferred_element_type=jnp.float32)
        y = y + params["ladder_b"][s][None, :, None, None]
        if s < 4:
            y = y * scale + shift
        x = _mish(y)
        for i in range(params["res_w1"][s].shape[0]):
            h = _mish(
                jnp.einsum("oi,nihw->nohw",
                           params["res_w1"][s][i].astype(md), x.astype(md),
                           precision=hp, preferred_element_type=jnp.float32)
                + params["res_b1"][s][i][None, :, None, None])
            x = (x
                 + jnp.einsum("oi,nihw->nohw",
                              params["res_w2"][s][i].astype(md), h.astype(md),
                              precision=hp, preferred_element_type=jnp.float32)
                 + params["res_b2"][s][i][None, :, None, None])
        x = _mish(x)
    out = jnp.einsum("oi,nihw->nohw", params["final_w"].astype(md), x.astype(md),
                     precision=hp, preferred_element_type=jnp.float32)
    return out + params["final_b"][None, :, None, None]


# ----------------------------------- main ------------------------------------
if __name__ == "__main__":
    _ROLL_SIGN = _detect_roll_convention()   # probe once, before tracing the main kernel

    key = jax.random.PRNGKey(0)
    kx, kp = jax.random.split(key)

    in_channel, middle_channel, out_channel, num_block = 8, 16, 8, 2
    n, h, w = 8, 16, 16

    # Mapping.forward feeds x into LadderConv(in_channel // 2, ...), so the input
    # tensor has in_channel // 2 = 4 channels.
    x = jax.random.normal(kx, (n, in_channel // 2, h, w), jnp.float32)
    params = init_params(kp, in_channel, middle_channel, out_channel, num_block)

    fwd = jax.jit(mapping_forward)
    out = jax.block_until_ready(fwd(x, params))
    assert out.shape == (n, out_channel, h, w), out.shape

    # Tight parity: reference with matmul operands at the kernel's bf16 precision.
    ref_bf = ref_forward(x, params, matmul_dtype=_MXU_DTYPE)
    err_tight = float(jnp.max(jnp.abs(out - ref_bf)))
    assert jnp.allclose(out, ref_bf, atol=5e-3, rtol=5e-3), err_tight

    # Loose sanity: pure-f32 reference bounds the total bf16 quantization drift.
    ref_f32 = ref_forward(x, params, matmul_dtype=jnp.float32)
    err_loose = float(jnp.max(jnp.abs(out - ref_f32)))
    assert jnp.allclose(out, ref_f32, atol=1e-1, rtol=1e-1), err_loose

    print("KERNEL_OK")
</pallas_src>

<mosaic_0001>
module attributes {stable_mosaic.version = 11 : i64} {
  func.func @kern(%arg0: memref<8x128xf32, #tpu.memory_space<vmem>>, %arg1: memref<8x128xf32, #tpu.memory_space<vmem>>) attributes {dimension_semantics = [], scalar_prefetch = 0 : i64, scratch_operands = 0 : i64, tpu.core_type = #tpu.core_type<tc>} {
    %c0 = arith.constant 0 : index
    %c0_0 = arith.constant 0 : index
    %0 = vector.load %arg0[%c0, %c0_0] : memref<8x128xf32, #tpu.memory_space<vmem>>, vector<8x128xf32>
    %c1_i32 = arith.constant 1 : i32
    %1 = tpu.dynamic_rotate %0 by %c1_i32 dim 1 : vector<8x128xf32>, i32 -> vector<8x128xf32>
    %c0_1 = arith.constant 0 : index
    %c0_2 = arith.constant 0 : index
    %2 = vector.load %arg1[%c0_1, %c0_2] : memref<8x128xf32, #tpu.memory_space<vmem>>, vector<8x128xf32>
    tpu.vector_store %arg1[%c0_1, %c0_2], %1 {strides = array<i32>} : memref<8x128xf32, #tpu.memory_space<vmem>>, vector<8x128xf32>,
    return
  }
}

</mosaic_0001>

<llo_original>
// kernel: tpu_custom_call.1
$region0: #{tpu_custom_call.1}
  #allocation0 [shape = 'u32[]', space=smem, size = 0x4, offset = 0x4, fixed_abs, tag = 'smem constant byte address 0x4 - core index']
  #allocation1 [shape = 'u32[144,128]{1,0:T(1,128)}', space=vmem, size = 0x12000, scoped, tag = 'internal scratch']
  %s0 = inlined_call_operand.hbm [shape: f32[8,128], index: 0, kind: input, shape index: {}]
  %s1 = inlined_call_operand.hbm [shape: f32[8,128], index: 1, kind: output, shape index: {}]
  %s2 = sld [smem:[#allocation0]]
  $region18: #{tpu_custom_call.1} parent=0
    _
  %s4 = ssub.s32 1, %s2
  %s5 = scalar_select 0, %s4, %s2
  $region1: #{tpu_custom_call.1} parent=0
    #allocation2 [shape = 'u8[4096]{0}', space=vmem, size = 0x1000, scoped, tag = 'input window, operand 0, single buffered']
    #allocation3 [shape = 's32[1]{0}', space=sflag, size = 0x4, scoped, tag = 'scoped memory for tpu_custom_call.1']
    #allocation4 [shape = 's32[1]{0}', space=sflag, size = 0x4, scoped, tag = 'scoped memory for tpu_custom_call.1']
    #allocation5 [shape = 'u8[4096]{0}', space=vmem, size = 0x1000, scoped, tag = 'output window, operand 0, single buffered']
    %6 = vsyncpa [#allocation3], 0
    %7 = vsyncpa [#allocation4], 0
    // Predicated region
    $region2: #{tpu_custom_call.1} parent=1 // pred_check
      _
    $region3: #{tpu_custom_call.1} parent=1 // pred_check_branch
      %9 = sbr.rel (0) target = $region5
    $region4: #{tpu_custom_call.1} parent=1 // pred_region
      %s11 = ssub.s32 128, 128
      %12 = vsyncadd [#allocation3], %s11
      %s14 = sshll.u32 [#allocation2], 4
      %s15 = int_to_ptr.vmem [resolvable:$true] %s14
      %17 = dma.hbm_to_vmem [thread:$0]  %s0, 128, %s15, [#allocation3]
    $region5: #{tpu_custom_call.1} parent=1 // pred_fallthru
      _
    // Predicated region
    $region6: #{tpu_custom_call.1} parent=1 // pred_check
      _
    $region7: #{tpu_custom_call.1} parent=1 // pred_check_branch
      %19 = sbr.rel (0) target = $region9
    $region8: #{tpu_custom_call.1} parent=1 // pred_region
      %20 = dma.done [#allocation3], 128
    $region9: #{tpu_custom_call.1} parent=1 // pred_fallthru
      _
    %v21 = vld [vmem:[#allocation2] sm:$0xff]
    %22 = vrot.lane.b32.xlu0 %v21, 1
    %v23 = vpop.permute.xlu0 %22
    %24 = vst [vmem:[#allocation5] sm:$0xff] %v23
    // Predicated region
    $region10: #{tpu_custom_call.1} parent=1 // pred_check
      _
    $region11: #{tpu_custom_call.1} parent=1 // pred_check_branch
      %26 = sbr.rel (0) target = $region13
    $region12: #{tpu_custom_call.1} parent=1 // pred_region
      %s28 = ssub.s32 128, 128
      %29 = vsyncadd [#allocation4], %s28
      %s31 = sshll.u32 [#allocation5], 4
      %s32 = int_to_ptr.vmem [resolvable:$true] %s31
      %34 = dma.vmem_to_hbm [thread:$0]  %s32, 128, %s1, [#allocation4]
    $region13: #{tpu_custom_call.1} parent=1 // pred_fallthru
      _
    // Predicated region
    $region14: #{tpu_custom_call.1} parent=1 // pred_check
      _
    $region15: #{tpu_custom_call.1} parent=1 // pred_check_branch
      %36 = sbr.rel (0) target = $region17
    $region16: #{tpu_custom_call.1} parent=1 // pred_region
      %37 = dma.done [#allocation4], 128
    $region17: #{tpu_custom_call.1} parent=1 // pred_fallthru
      _
    %38 = vsyncpa [#allocation3], 1
    %39 = vsyncpa [#allocation4], 1

</llo_original>
